<compile_context>
chip_gen: v5e
topology: v5e:2x2
jax: 0.10.0
libtpu: 0.0.40
codegen_flags: <defaults>
</compile_context>

<pallas_src>
import jax
import jax.numpy as jnp
from jax.experimental import pallas as pl
from jax.experimental.pallas import tpu as pltpu


def _round_up(x, m):
    return (x + m - 1) // m * m


def _curve_kernel(v_dirs_ref, scales_ref, cn_ref, out_ref):
    # Single gridless VMEM block, channel-leading layout.
    #   v_dirs_ref : (3, N, S_pad)  canonical direction vectors
    #   scales_ref : (3, N, S_pad)  axis-0 rows: [init_scale, scale, nx_scale]
    #   cn_ref     : (2, 3, N, 1)   [0] = curve centers, [1] = mean normals
    #   out_ref    : (3, N, S_pad)
    init_s = scales_ref[0]                        # (N, S_pad)
    relu_s = jnp.maximum(scales_ref[1], 0.0)      # relu(scale)
    nx_s = scales_ref[2]                          # (N, S_pad)
    s = init_s * relu_s                           # hoisted; reused by all 3 channels
    for c in range(3):                            # static unroll over xyz channels
        out_ref[c] = (cn_ref[0, c]                # center  (N,1) -> lane broadcast
                      + v_dirs_ref[c] * s         # (N,S_pad) * (N,S_pad)
                      + nx_s * cn_ref[1, c])      # nx      (N,1) -> lane broadcast


def pack_curve_inputs(cano_v_dirs, init_scale, scale, nx_scale,
                      cano_verts_center, cano_nx):
    """One-time layout transform (analogue of buffer/parameter registration):
    PyTorch layout -> channel-leading, lane-padded, stacked scalars.
    In production these packed arrays are the RESTING format of the buffers /
    parameters, so the per-step forward does zero transposes/pads."""
    N, S, _ = cano_v_dirs.shape
    S_pad = _round_up(max(S, 128), 128)
    pad = S_pad - S

    # (3, N, S_pad) channel-leading direction vectors
    v_dirs_t = jnp.transpose(cano_v_dirs, (2, 0, 1))                   # (3, N, S)
    v_dirs_p = jnp.pad(v_dirs_t, ((0, 0), (0, 0), (0, pad)))           # (3, N, S_pad)

    # (3, N, S_pad) stacked per-sample scalars: [init_scale, scale, nx_scale]
    scales = jnp.stack([init_scale[..., 0], scale[..., 0], nx_scale[..., 0]],
                       axis=0)                                         # (3, N, S)
    scales_p = jnp.pad(scales, ((0, 0), (0, 0), (0, pad)))             # (3, N, S_pad)

    # (2, 3, N, 1) merged per-curve constants: [0]=center, [1]=mean normal
    center_t = jnp.transpose(cano_verts_center, (2, 0, 1))             # (3, N, 1)
    nx_t = jnp.transpose(cano_nx, (2, 0, 1))                           # (3, N, 1)
    cn_p = jnp.stack([center_t, nx_t], axis=0)                         # (2, 3, N, 1)

    return v_dirs_p, scales_p, cn_p, S


def intersect_free_curve_forward_packed(v_dirs_p, scales_p, cn_p):
    """Hot path: single-block Pallas call on pre-packed channel-leading data.
    Whole problem (~40 KiB at N=4, S_pad=256) is one VMEM block; no grid."""
    _, N, S_pad = v_dirs_p.shape
    vmem = pl.BlockSpec(memory_space=pltpu.MemorySpace.VMEM)
    return pl.pallas_call(
        _curve_kernel,
        out_shape=jax.ShapeDtypeStruct((3, N, S_pad), v_dirs_p.dtype),
        in_specs=[vmem, vmem, vmem],
        out_specs=vmem,
    )(v_dirs_p, scales_p, cn_p)


def unpack_curve_output(out_p, S):
    """Only for consumers that need the PyTorch (N, S, 3) layout; NOT part of
    the hot path — steady-state consumers should stay on the packed layout."""
    return jnp.transpose(out_p[:, :, :S], (1, 2, 0))


def build_buffers_and_params(key, num_curves=4, sample_num=200):
    """Deterministically reproduce initialize_parameters() from synthetic
    uniform curve samples (no trimesh / no checkpoint)."""
    k_verts, k_scale, k_nxs = jax.random.split(key, 3)

    # synthetic "uniformly sampled canonical curve vertices" (N, S, 3)
    cano_verts = jax.random.normal(k_verts, (num_curves, sample_num, 3),
                                   dtype=jnp.float32)

    cano_verts_center = jnp.mean(cano_verts, axis=1, keepdims=True)      # (N,1,3)
    diff = cano_verts - cano_verts_center
    cano_v_dirs = diff / (jnp.linalg.norm(diff, axis=-1, keepdims=True) + 1e-6)

    nx = jnp.cross(cano_v_dirs[:, :-1, :], cano_v_dirs[:, 1:, :])
    nx = nx / (jnp.linalg.norm(nx, axis=-1, keepdims=True) + 1e-6)       # eps: no NaN
    cano_nx = jnp.mean(nx, axis=1, keepdims=True)                        # (N,1,3)

    init_scale = jnp.sum(diff * cano_v_dirs, axis=-1, keepdims=True)     # (N,S,1)
    init_scale = jnp.maximum(init_scale, 0.0)                            # clamp_min

    # module inits scale=1, nx_scale=0; perturb deterministically so the
    # relu / nx branches are actually exercised.
    scale = 1.0 + 0.5 * jax.random.normal(k_scale, init_scale.shape,
                                          dtype=jnp.float32)
    nx_scale = 0.1 * jax.random.normal(k_nxs, init_scale.shape,
                                       dtype=jnp.float32)

    return cano_v_dirs, init_scale, scale, nx_scale, cano_verts_center, cano_nx


def reference_forward(cano_v_dirs, init_scale, scale, nx_scale,
                      cano_verts_center, cano_nx):
    v_dir_offset = cano_v_dirs * init_scale * jax.nn.relu(scale)
    nx_offset = nx_scale * cano_nx
    return cano_verts_center + v_dir_offset + nx_offset


# TODO(synk): __init__-time mesh preprocessing (trimesh.outline, uniformsample3d,
# cano2canosmpl) and the regularization()/curve_to_mesh() utilities are host-side
# geometry code, not part of forward(); they are not translated to Pallas.

if __name__ == "__main__":
    key = jax.random.PRNGKey(0)
    N, S = 4, 200  # 4 feature-line curves, sample_num=200 (module default)

    (cano_v_dirs, init_scale, scale, nx_scale,
     cano_verts_center, cano_nx) = build_buffers_and_params(key, N, S)

    # One-time layout packing (resting format of buffers/params).
    v_dirs_p, scales_p, cn_p, S_real = pack_curve_inputs(
        cano_v_dirs, init_scale, scale, nx_scale, cano_verts_center, cano_nx)

    # Hot path: packed in, packed out, no transposes.
    forward_packed = jax.jit(intersect_free_curve_forward_packed)
    out_p = forward_packed(v_dirs_p, scales_p, cn_p)
    out_p = jax.block_until_ready(out_p)

    # Verification only: unpack to the PyTorch layout and compare.
    out = unpack_curve_output(out_p, S_real)
    ref = reference_forward(cano_v_dirs, init_scale, scale, nx_scale,
                            cano_verts_center, cano_nx)

    assert out.shape == (N, S, 3), out.shape
    assert bool(jnp.all(jnp.isfinite(ref))), "reference produced non-finite values"
    assert jnp.allclose(out, ref, atol=1e-5, rtol=1e-5), "mismatch vs reference"

    print("KERNEL_OK")
</pallas_src>

<mosaic_0001>
module attributes {stable_mosaic.version = 11 : i64} {
  func.func @_curve_kernel(%arg0: memref<3x4x256xf32, #tpu.memory_space<vmem>>, %arg1: memref<3x4x256xf32, #tpu.memory_space<vmem>>, %arg2: memref<2x3x4x1xf32, #tpu.memory_space<vmem>>, %arg3: memref<3x4x256xf32, #tpu.memory_space<vmem>>) attributes {dimension_semantics = [], scalar_prefetch = 0 : i64, scratch_operands = 0 : i64, tpu.core_type = #tpu.core_type<tc>} {
    %c0 = arith.constant 0 : index
    %c0_0 = arith.constant 0 : index
    %c0_1 = arith.constant 0 : index
    %0 = vector.load %arg1[%c0, %c0_0, %c0_1] : memref<3x4x256xf32, #tpu.memory_space<vmem>>, vector<1x4x256xf32>
    %1 = vector.shape_cast %0 : vector<1x4x256xf32> to vector<4x256xf32>
    %c1 = arith.constant 1 : index
    %c0_2 = arith.constant 0 : index
    %c0_3 = arith.constant 0 : index
    %2 = vector.load %arg1[%c1, %c0_2, %c0_3] : memref<3x4x256xf32, #tpu.memory_space<vmem>>, vector<1x4x256xf32>
    %3 = vector.shape_cast %2 : vector<1x4x256xf32> to vector<4x256xf32>
    %cst = arith.constant 0.000000e+00 : f32
    %4 = vector.broadcast %cst : f32 to vector<4x256xf32>
    %5 = arith.maximumf %3, %4 : vector<4x256xf32>
    %c2 = arith.constant 2 : index
    %c0_4 = arith.constant 0 : index
    %c0_5 = arith.constant 0 : index
    %6 = vector.load %arg1[%c2, %c0_4, %c0_5] : memref<3x4x256xf32, #tpu.memory_space<vmem>>, vector<1x4x256xf32>
    %7 = vector.shape_cast %6 : vector<1x4x256xf32> to vector<4x256xf32>
    %8 = arith.mulf %1, %5 : vector<4x256xf32>
    %c0_6 = arith.constant 0 : index
    %c0_7 = arith.constant 0 : index
    %c0_8 = arith.constant 0 : index
    %c0_9 = arith.constant 0 : index
    %9 = vector.load %arg2[%c0_6, %c0_7, %c0_8, %c0_9] : memref<2x3x4x1xf32, #tpu.memory_space<vmem>>, vector<1x1x4x1xf32>
    %10 = vector.shape_cast %9 : vector<1x1x4x1xf32> to vector<4x1xf32>
    %c0_10 = arith.constant 0 : index
    %c0_11 = arith.constant 0 : index
    %c0_12 = arith.constant 0 : index
    %11 = vector.load %arg0[%c0_10, %c0_11, %c0_12] : memref<3x4x256xf32, #tpu.memory_space<vmem>>, vector<1x4x256xf32>
    %12 = vector.shape_cast %11 : vector<1x4x256xf32> to vector<4x256xf32>
    %13 = arith.mulf %12, %8 : vector<4x256xf32>
    %14 = vector.broadcast %10 : vector<4x1xf32> to vector<4x256xf32>
    %15 = arith.addf %14, %13 : vector<4x256xf32>
    %c1_13 = arith.constant 1 : index
    %c0_14 = arith.constant 0 : index
    %c0_15 = arith.constant 0 : index
    %c0_16 = arith.constant 0 : index
    %16 = vector.load %arg2[%c1_13, %c0_14, %c0_15, %c0_16] : memref<2x3x4x1xf32, #tpu.memory_space<vmem>>, vector<1x1x4x1xf32>
    %17 = vector.shape_cast %16 : vector<1x1x4x1xf32> to vector<4x1xf32>
    %18 = vector.broadcast %17 : vector<4x1xf32> to vector<4x256xf32>
    %19 = arith.mulf %7, %18 : vector<4x256xf32>
    %20 = arith.addf %15, %19 : vector<4x256xf32>
    %c0_17 = arith.constant 0 : index
    %c0_18 = arith.constant 0 : index
    %c0_19 = arith.constant 0 : index
    %21 = vector.load %arg3[%c0_17, %c0_18, %c0_19] : memref<3x4x256xf32, #tpu.memory_space<vmem>>, vector<1x4x256xf32>
    %22 = vector.shape_cast %21 : vector<1x4x256xf32> to vector<4x256xf32>
    %23 = vector.shape_cast %20 : vector<4x256xf32> to vector<1x4x256xf32>
    tpu.vector_store %arg3[%c0_17, %c0_18, %c0_19], %23 {strides = array<i32>} : memref<3x4x256xf32, #tpu.memory_space<vmem>>, vector<1x4x256xf32>,
    %c0_20 = arith.constant 0 : index
    %c1_21 = arith.constant 1 : index
    %c0_22 = arith.constant 0 : index
    %c0_23 = arith.constant 0 : index
    %24 = vector.load %arg2[%c0_20, %c1_21, %c0_22, %c0_23] : memref<2x3x4x1xf32, #tpu.memory_space<vmem>>, vector<1x1x4x1xf32>
    %25 = vector.shape_cast %24 : vector<1x1x4x1xf32> to vector<4x1xf32>
    %c1_24 = arith.constant 1 : index
    %c0_25 = arith.constant 0 : index
    %c0_26 = arith.constant 0 : index
    %26 = vector.load %arg0[%c1_24, %c0_25, %c0_26] : memref<3x4x256xf32, #tpu.memory_space<vmem>>, vector<1x4x256xf32>
    %27 = vector.shape_cast %26 : vector<1x4x256xf32> to vector<4x256xf32>
    %28 = arith.mulf %27, %8 : vector<4x256xf32>
    %29 = vector.broadcast %25 : vector<4x1xf32> to vector<4x256xf32>
    %30 = arith.addf %29, %28 : vector<4x256xf32>
    %c1_27 = arith.constant 1 : index
    %c1_28 = arith.constant 1 : index
    %c0_29 = arith.constant 0 : index
    %c0_30 = arith.constant 0 : index
    %31 = vector.load %arg2[%c1_27, %c1_28, %c0_29, %c0_30] : memref<2x3x4x1xf32, #tpu.memory_space<vmem>>, vector<1x1x4x1xf32>
    %32 = vector.shape_cast %31 : vector<1x1x4x1xf32> to vector<4x1xf32>
    %33 = vector.broadcast %32 : vector<4x1xf32> to vector<4x256xf32>
    %34 = arith.mulf %7, %33 : vector<4x256xf32>
    %35 = arith.addf %30, %34 : vector<4x256xf32>
    %c1_31 = arith.constant 1 : index
    %c0_32 = arith.constant 0 : index
    %c0_33 = arith.constant 0 : index
    %36 = vector.load %arg3[%c1_31, %c0_32, %c0_33] : memref<3x4x256xf32, #tpu.memory_space<vmem>>, vector<1x4x256xf32>
    %37 = vector.shape_cast %36 : vector<1x4x256xf32> to vector<4x256xf32>
    %38 = vector.shape_cast %35 : vector<4x256xf32> to vector<1x4x256xf32>
    tpu.vector_store %arg3[%c1_31, %c0_32, %c0_33], %38 {strides = array<i32>} : memref<3x4x256xf32, #tpu.memory_space<vmem>>, vector<1x4x256xf32>,
    %c0_34 = arith.constant 0 : index
    %c2_35 = arith.constant 2 : index
    %c0_36 = arith.constant 0 : index
    %c0_37 = arith.constant 0 : index
    %39 = vector.load %arg2[%c0_34, %c2_35, %c0_36, %c0_37] : memref<2x3x4x1xf32, #tpu.memory_space<vmem>>, vector<1x1x4x1xf32>
    %40 = vector.shape_cast %39 : vector<1x1x4x1xf32> to vector<4x1xf32>
    %c2_38 = arith.constant 2 : index
    %c0_39 = arith.constant 0 : index
    %c0_40 = arith.constant 0 : index
    %41 = vector.load %arg0[%c2_38, %c0_39, %c0_40] : memref<3x4x256xf32, #tpu.memory_space<vmem>>, vector<1x4x256xf32>
    %42 = vector.shape_cast %41 : vector<1x4x256xf32> to vector<4x256xf32>
    %43 = arith.mulf %42, %8 : vector<4x256xf32>
    %44 = vector.broadcast %40 : vector<4x1xf32> to vector<4x256xf32>
    %45 = arith.addf %44, %43 : vector<4x256xf32>
    %c1_41 = arith.constant 1 : index
    %c2_42 = arith.constant 2 : index
    %c0_43 = arith.constant 0 : index
    %c0_44 = arith.constant 0 : index
    %46 = vector.load %arg2[%c1_41, %c2_42, %c0_43, %c0_44] : memref<2x3x4x1xf32, #tpu.memory_space<vmem>>, vector<1x1x4x1xf32>
    %47 = vector.shape_cast %46 : vector<1x1x4x1xf32> to vector<4x1xf32>
    %48 = vector.broadcast %47 : vector<4x1xf32> to vector<4x256xf32>
    %49 = arith.mulf %7, %48 : vector<4x256xf32>
    %50 = arith.addf %45, %49 : vector<4x256xf32>
    %c2_45 = arith.constant 2 : index
    %c0_46 = arith.constant 0 : index
    %c0_47 = arith.constant 0 : index
    %51 = vector.load %arg3[%c2_45, %c0_46, %c0_47] : memref<3x4x256xf32, #tpu.memory_space<vmem>>, vector<1x4x256xf32>
    %52 = vector.shape_cast %51 : vector<1x4x256xf32> to vector<4x256xf32>
    %53 = vector.shape_cast %50 : vector<4x256xf32> to vector<1x4x256xf32>
    tpu.vector_store %arg3[%c2_45, %c0_46, %c0_47], %53 {strides = array<i32>} : memref<3x4x256xf32, #tpu.memory_space<vmem>>, vector<1x4x256xf32>,
    return
  }
}

</mosaic_0001>

<llo_original>
// kernel: intersect_free_curve_forward_packed.1
$region0: #{intersect_free_curve_forward_packed.1}
  #allocation0 [shape = 'u32[]', space=smem, size = 0x4, offset = 0x4, fixed_abs, tag = 'smem constant byte address 0x4 - core index']
  #allocation1 [shape = 'u32[72,128]{1,0:T(1,128)}', space=vmem, size = 0x9000, scoped, tag = 'internal scratch']
  %s0 = inlined_call_operand.vmem [shape: f32[3,4,256], index: 0, kind: input, shape index: {}]
  %s1 = inlined_call_operand.hbm [shape: f32[3,4,256], index: 1, kind: input, shape index: {}]
  %s2 = inlined_call_operand.vmem [shape: f32[2,3,4,1], index: 2, kind: input, shape index: {}]
  %s3 = inlined_call_operand.hbm [shape: f32[3,4,256], index: 3, kind: output, shape index: {}]
  %s4 = sld [smem:[#allocation0]]
  $region26: #{intersect_free_curve_forward_packed.1} parent=0
    _
  %s6 = ssub.s32 1, %s4
  %s7 = scalar_select 0, %s6, %s4
  $region1: #{intersect_free_curve_forward_packed.1} parent=0
    #allocation2 [shape = 'u8[12288]{0}', space=vmem, size = 0x3000, scoped, tag = 'input window, operand 1, single buffered']
    #allocation3 [shape = 's32[1]{0}', space=sflag, size = 0x4, scoped, tag = 'scoped memory for intersect_free_curve_forward_packed.1']
    #allocation4 [shape = 's32[1]{0}', space=sflag, size = 0x4, scoped, tag = 'scoped memory for intersect_free_curve_forward_packed.1']
    #allocation5 [shape = 'u8[12288]{0}', space=vmem, size = 0x3000, scoped, tag = 'output window, operand 0, single buffered']
    %8 = vsyncpa [#allocation3], 0
    %9 = vsyncpa [#allocation4], 0
    // Predicated region
    $region2: #{intersect_free_curve_forward_packed.1} parent=1 // pred_check
      _
    $region3: #{intersect_free_curve_forward_packed.1} parent=1 // pred_check_branch
      %11 = sbr.rel (0) target = $region5
    $region4: #{intersect_free_curve_forward_packed.1} parent=1 // pred_region
      _
    $region5: #{intersect_free_curve_forward_packed.1} parent=1 // pred_fallthru
      _
    // Predicated region
    $region6: #{intersect_free_curve_forward_packed.1} parent=1 // pred_check
      _
    $region7: #{intersect_free_curve_forward_packed.1} parent=1 // pred_check_branch
      %13 = sbr.rel (0) target = $region9
    $region8: #{intersect_free_curve_forward_packed.1} parent=1 // pred_region
      %15 = vsyncadd [#allocation3], 0
      %s16 = sshll.u32 %s1, 4
      %s17 = int_to_ptr.hbm [resolvable:$true] %s16
      %s18 = sshll.u32 [#allocation2], 4
      %s19 = int_to_ptr.vmem [resolvable:$true] %s18
      %24 = dma.hbm_to_vmem [thread:$0]  %s17, 384, %s19, [#allocation3], 128, 128, 8
    $region9: #{intersect_free_curve_forward_packed.1} parent=1 // pred_fallthru
      _
    // Predicated region
    $region10: #{intersect_free_curve_forward_packed.1} parent=1 // pred_check
      _
    $region11: #{intersect_free_curve_forward_packed.1} parent=1 // pred_check_branch
      %26 = sbr.rel (0) target = $region13
    $region12: #{intersect_free_curve_forward_packed.1} parent=1 // pred_region
      _
    $region13: #{intersect_free_curve_forward_packed.1} parent=1 // pred_fallthru
      _
    // Predicated region
    $region14: #{intersect_free_curve_forward_packed.1} parent=1 // pred_check
      _
    $region15: #{intersect_free_curve_forward_packed.1} parent=1 // pred_check_branch
      %28 = sbr.rel (0) target = $region17
    $region16: #{intersect_free_curve_forward_packed.1} parent=1 // pred_region
      %30 = dma.done [#allocation3], 384
    $region17: #{intersect_free_curve_forward_packed.1} parent=1 // pred_fallthru
      _
    %v31 = vld [vmem:[#allocation2] sm:$0xff]
    %s32 = scalar_lea.vmem [#allocation2], 8
    %v33 = vld [vmem:[%s32] sm:$0xff]
    %v34 = vmax.f32 %v33, 0.0
    %s35 = scalar_lea.vmem [#allocation2], 16
    %v36 = vld [vmem:[%s35] sm:$0xff]
    %v37 = vmul.f32 %v31, %v34
    %v38 = vld [vmem:[%s2] sm:$0xf]
    %v39 = vld [vmem:[%s0] sm:$0xff]
    %v40 = vmul.f32 %v39, %v37
    %42 = vset.pattern.permute.xlu0 0
    %43 = vperm.xlu0 %42, %v38
    %v44 = vpop.permute.xlu0 %43
    %47 = vst [vmem:[#allocation1] ss:$2 sm:$0xff] %v40
    %v48 = vld.sshfl [vmem:[#allocation1] sm:$0xff pattern:$0x75316420]
    %v49 = vld.sshfl [vmem:[#allocation1 + $0x8] sm:$0xff pattern:$0x75316420]
    %v52 = vadd.f32 %v44, %v48
    %v53 = vadd.f32 %v44, %v49
    %s54 = scalar_lea.vmem %s2, 12
    %v55 = vld [vmem:[%s54] sm:$0xf]
    %57 = vset.pattern.permute.xlu0 0
    %58 = vperm.xlu0 %57, %v55
    %v59 = vpop.permute.xlu0 %58
    %v61 = vunpack.c.l.s4 839922192
    %v62 = vunpack.c.0.s8 %v61
    %v63 = vperm.slane %v59, %v62
    %v65 = vmul.f32 %v36, %v63
    %67 = vst [vmem:[#allocation1] ss:$2 sm:$0xff] %v65
    %v68 = vld.sshfl [vmem:[#allocation1] sm:$0xff pattern:$0x75316420]
    %v69 = vld.sshfl [vmem:[#allocation1 + $0x8] sm:$0xff pattern:$0x75316420]
    %v72 = vadd.f32 %v52, %v68
    %v73 = vadd.f32 %v53, %v69
    %v76 = vrot.slane %v73, 4
    %vm77 = vcmask 1043456
    %v78 = vsel %vm77, %v72, %v76
    %80 = vst [vmem:[#allocation5] sm:$0xff] %v78
    %s81 = scalar_lea.vmem %s2, 4
    %v82 = vld [vmem:[%s81] sm:$0xf]
    %s83 = scalar_lea.vmem %s0, 8
    %v84 = vld [vmem:[%s83] sm:$0xff]
    %v85 = vmul.f32 %v84, %v37
    %87 = vset.pattern.permute.xlu0 0
    %88 = vperm.xlu0 %87, %v82
    %v89 = vpop.permute.xlu0 %88
    %92 = vst [vmem:[#allocation1] ss:$2 sm:$0xff] %v85
    %v93 = vld.sshfl [vmem:[#allocation1] sm:$0xff pattern:$0x75316420]
    %v94 = vld.sshfl [vmem:[#allocation1 + $0x8] sm:$0xff pattern:$0x75316420]
    %v97 = vadd.f32 %v89, %v93
    %v98 = vadd.f32 %v89, %v94
    %s99 = scalar_lea.vmem %s2, 16
    %v100 = vld [vmem:[%s99] sm:$0xf]
    %102 = vset.pattern.permute.xlu0 0
    %103 = vperm.xlu0 %102, %v100
    %v104 = vpop.permute.xlu0 %103
    %v106 = vunpack.c.l.s4 839922192
    %v107 = vunpack.c.0.s8 %v106
    %v108 = vperm.slane %v104, %v107
    %v110 = vmul.f32 %v36, %v108
    %112 = vst [vmem:[#allocation1] ss:$2 sm:$0xff] %v110
    %v113 = vld.sshfl [vmem:[#allocation1] sm:$0xff pattern:$0x75316420]
    %v114 = vld.sshfl [vmem:[#allocation1 + $0x8] sm:$0xff pattern:$0x75316420]
    %v117 = vadd.f32 %v97, %v113
    %v118 = vadd.f32 %v98, %v114
    %v121 = vrot.slane %v118, 4
    %v122 = vsel %vm77, %v117, %v121
    %s124 = scalar_lea.vmem [#allocation5], 8
    %125 = vst [vmem:[%s124] sm:$0xff] %v122
    %s126 = scalar_lea.vmem %s2, 8
    %v127 = vld [vmem:[%s126] sm:$0xf]
    %s128 = scalar_lea.vmem %s0, 16
    %v129 = vld [vmem:[%s128] sm:$0xff]
    %v130 = vmul.f32 %v129, %v37
    %132 = vset.pattern.permute.xlu0 0
    %133 = vperm.xlu0 %132, %v127
    %v134 = vpop.permute.xlu0 %133
    %137 = vst [vmem:[#allocation1] ss:$2 sm:$0xff] %v130
    %v138 = vld.sshfl [vmem:[#allocation1] sm:$0xff pattern:$0x75316420]
    %v139 = vld.sshfl [vmem:[#allocation1 + $0x8] sm:$0xff pattern:$0x75316420]
    %v142 = vadd.f32 %v134, %v138
    %v143 = vadd.f32 %v134, %v139
    %s144 = scalar_lea.vmem %s2, 20
    %v145 = vld [vmem:[%s144] sm:$0xf]
    %147 = vset.pattern.permute.xlu0 0
    %148 = vperm.xlu0 %147, %v145
    %v149 = vpop.permute.xlu0 %148
    %v151 = vunpack.c.l.s4 839922192
    %v152 = vunpack.c.0.s8 %v151
    %v153 = vperm.slane %v149, %v152
    %v155 = vmul.f32 %v36, %v153
    %157 = vst [vmem:[#allocation1] ss:$2 sm:$0xff] %v155
    %v158 = vld.sshfl [vmem:[#allocation1] sm:$0xff pattern:$0x75316420]
    %v159 = vld.sshfl [vmem:[#allocation1 + $0x8] sm:$0xff pattern:$0x75316420]
    %v162 = vadd.f32 %v142, %v158
    %v163 = vadd.f32 %v143, %v159
    %v166 = vrot.slane %v163, 4
    %v167 = vsel %vm77, %v162, %v166
    %s169 = scalar_lea.vmem [#allocation5], 16
    %170 = vst [vmem:[%s169] sm:$0xff] %v167
    // Predicated region
    $region18: #{intersect_free_curve_forward_packed.1} parent=1 // pred_check
      _
    $region19: #{intersect_free_curve_forward_packed.1} parent=1 // pred_check_branch
      %172 = sbr.rel (0) target = $region21
    $region20: #{intersect_free_curve_forward_packed.1} parent=1 // pred_region
      %174 = vsyncadd [#allocation4], 0
      %s175 = sshll.u32 [#allocation5], 4
      %s176 = int_to_ptr.vmem [resolvable:$true] %s175
      %s177 = sshll.u32 %s3, 4
      %s178 = int_to_ptr.hbm [resolvable:$true] %s177
      %183 = dma.vmem_to_hbm [thread:$0]  %s176, 384, %s178, [#allocation4], 128, 128, 8
    $region21: #{intersect_free_curve_forward_packed.1} parent=1 // pred_fallthru
      _
    // Predicated region
    $region22: #{intersect_free_curve_forward_packed.1} parent=1 // pred_check
      _
    $region23: #{intersect_free_curve_forward_packed.1} parent=1 // pred_check_branch
      %185 = sbr.rel (0) target = $region25
    $region24: #{intersect_free_curve_forward_packed.1} parent=1 // pred_region
      %187 = dma.done [#allocation4], 384
    $region25: #{intersect_free_curve_forward_packed.1} parent=1 // pred_fallthru
      _
    %188 = vsyncpa [#allocation3], 1
    %189 = vsyncpa [#allocation4], 1

</llo_original>
